<compile_context>
chip_gen: v6e
topology: v6e:2x2x1
jax: 0.10.0
libtpu: 0.0.40
codegen_flags: <defaults>
</compile_context>

<pallas_src>
import functools

import jax
import jax.numpy as jnp
from jax import lax
from jax.experimental import pallas as pl
from jax.experimental.pallas import tpu as pltpu


# ----------------------------------------------------------------------------
# Fused decoder kernel (one grid step == one full sample), channel-major:
#   im_ref   : (1, K, HW)  im2col slab [9 taps x (4*Cin up-path | 4*Cskip skip-path)]
#   w_ref    : (C, K)      composed weight (conv-transpose folded into the 3x3 conv)
#   bias_ref : (C, HW)     conv bias + border-masked conv-transpose bias map
#   g_ref    : (C, 1)      LayerNorm gamma (tiled per sub-pixel phase)
#   beta_ref : (C, 1)      LayerNorm beta
#   o_ref    : (1, C, HW)  output in space-to-depth, channel-major layout
# with C = 4*Cout, HW = H*W (low-res), K = 9*(4*Cin + 4*Cskip).
# ----------------------------------------------------------------------------
def _decoder_kernel(im_ref, w_ref, bias_ref, g_ref, beta_ref, o_ref):
    C = o_ref.shape[1]
    HW = o_ref.shape[2]

    # 1) ConvTranspose2d + concat + Conv2d(3x3), composed into ONE matmul:
    #    (C, K) @ (K, HW) -> (C, HW); lane-dense, accumulation stays in the MXU.
    acc = jnp.dot(w_ref[...], im_ref[0], preferred_element_type=jnp.float32)
    acc = acc + bias_ref[...]

    # 2) per-sample LayerNorm (GroupNorm(1, C) semantics), two-pass centered
    #    variance (no cancellation / negative var), gamma folded into the scale.
    total = float(C * HW)
    mean = jnp.sum(acc) / total
    cen = acc - mean
    var = jnp.sum(cen * cen) / total
    scale = lax.rsqrt(var + 1e-5) * g_ref[...]        # (C, 1): lane-broadcast
    y = cen * scale + beta_ref[...]

    # 3) ReLU6, lane-dense unmasked store.
    o_ref[0] = jnp.clip(y, 0.0, 6.0)


def _phase_split(p, d):
    """Low-res row/col index of (2*i + p + d - 1): returns (delta_i, phase)."""
    r = p + d - 1
    pp = r % 2
    return (r - pp) // 2, pp


# ----------------------------------------------------------------------------
# Full forward pass.  Wrapper does only layout glue (space-to-depth, im2col
# gather) and one-time weight composition; all conv / norm / activation math
# runs inside the single Pallas kernel.
# ----------------------------------------------------------------------------
def conv_transpose_decoder_2d_v2(x, skip, params):
    """x: (N, Cin, H, W), skip: (N, Cskip, 2H, 2W) NCHW; returns (N, Cout, 2H, 2W)."""
    N, Cin, H, W = x.shape
    Cskip = skip.shape[1]
    f32 = jnp.float32
    w_t = params["conv_transpose_weight"].astype(f32)   # (Cin, Cout, 3, 3)
    b_t = params["conv_transpose_bias"].astype(f32)     # (Cout,)
    w_c = params["conv_weight"].astype(f32)             # (Cout, Cout+Cskip, 3, 3)
    b_c = params["conv_bias"].astype(f32)
    gamma = params["norm_weight"].astype(f32)
    beta = params["norm_bias"].astype(f32)
    Cout = w_t.shape[1]
    Ho, Wo = 2 * H, 2 * W
    HW = H * W
    C_up, C_sk = 4 * Cout, 4 * Cskip
    Kx, Ks = 9 * 4 * Cin, 9 * C_sk
    K_tot = Kx + Ks

    # ---- input layout glue: space-to-depth (channel-major) + 3x3 im2col ----
    xpad = jnp.pad(x.astype(f32), ((0, 0), (0, 0), (0, 1), (0, 1)))
    x4 = jnp.concatenate(                                   # (N, 4*Cin, H, W)
        [xpad[:, :, :H, :W], xpad[:, :, :H, 1:],
         xpad[:, :, 1:, :W], xpad[:, :, 1:, 1:]], axis=1)

    skip_s2d = (skip.astype(f32)
                .reshape(N, Cskip, H, 2, W, 2)
                .transpose(0, 3, 5, 1, 2, 4)                # (N, ph, pw, Cskip, H, W)
                .reshape(N, C_sk, H, W))

    def im2col3x3(a):                                       # (N, C, H, W) -> (N, 9*C, HW)
        ap = jnp.pad(a, ((0, 0), (0, 0), (1, 1), (1, 1)))
        cols = [ap[:, :, oi:oi + H, oj:oj + W]
                for oi in range(3) for oj in range(3)]
        return jnp.concatenate(cols, axis=1).reshape(N, 9 * a.shape[1], HW)

    im2col = jnp.concatenate([im2col3x3(x4), im2col3x3(skip_s2d)], axis=1)  # (N, K_tot, HW)

    # ---- weight composition (tiny, traced once) ----
    # (a) conv-transpose -> sub-pixel matmul weight Wp: (4*Cin, 4*Cout)
    wflip = jnp.transpose(w_t[:, :, ::-1, ::-1], (2, 3, 0, 1))   # wflip[kh,kw]:(Cin,Cout)
    phase_taps = {0: [(1, 0)], 1: [(0, 0), (2, 1)]}              # phase -> [(k, tap)]
    wp = jnp.zeros((2, 2, Cin, 2, 2, Cout), f32)
    for ph in (0, 1):
        for kh, ti in phase_taps[ph]:
            for pw in (0, 1):
                for kw, tj in phase_taps[pw]:
                    wp = wp.at[ti, tj, :, ph, pw, :].set(wflip[kh, kw])
    wp = wp.reshape(4 * Cin, C_up)

    # (b) 3x3 conv weight in space-to-depth space, split into up / skip parts.
    v = jnp.transpose(w_c, (2, 3, 1, 0))                         # v[dh,dw]:(Ccat,Cout)
    u_up = jnp.zeros((3, 3, C_up, C_up), f32)
    u_sk = jnp.zeros((3, 3, C_sk, C_up), f32)
    for ph in (0, 1):
        for pw in (0, 1):
            p_out = ph * 2 + pw
            for dh in range(3):
                di, phi = _phase_split(ph, dh)
                for dw in range(3):
                    dj, pwj = _phase_split(pw, dw)
                    p_in = phi * 2 + pwj
                    vt = v[dh, dw]
                    u_up = u_up.at[di + 1, dj + 1,
                                   p_in * Cout:(p_in + 1) * Cout,
                                   p_out * Cout:(p_out + 1) * Cout].set(vt[:Cout, :])
                    u_sk = u_sk.at[di + 1, dj + 1,
                                   p_in * Cskip:(p_in + 1) * Cskip,
                                   p_out * Cout:(p_out + 1) * Cout].set(vt[Cout:, :])
    u_up = u_up.reshape(9, C_up, C_up)
    u_sk = u_sk.reshape(9, C_sk, C_up)

    # (c) fold the conv-transpose into the conv's up-path taps: A[t] = Wp @ U_up[t]
    a_comp = jnp.einsum('cb,tbd->tcd', wp, u_up).reshape(Kx, C_up)
    w_full = jnp.concatenate([a_comp, u_sk.reshape(Ks, C_up)], axis=0)   # (K_tot, C_up)
    w_t_full = w_full.T                                                  # (C_up, K_tot)

    # (d) bias map: conv bias + conv-transpose bias routed through the up taps,
    #     masked where the 3x3 window falls in the zero ring around the up map.
    b_ph = jnp.tile(b_t, 4)                                   # (C_up,)
    bvec = jnp.einsum('c,tcd->td', b_ph, u_up)                # (9, C_up)
    ones_pad = jnp.pad(jnp.ones((H, W), f32), ((1, 1), (1, 1)))
    win = jnp.stack([ones_pad[oi:oi + H, oj:oj + W]
                     for oi in range(3) for oj in range(3)], axis=0)     # (9, H, W)
    bias_map = jnp.tile(b_c, 4)[None, None, :] + jnp.einsum('thw,td->hwd', win, bvec)
    bias_t = bias_map.reshape(HW, C_up).T                     # (C_up, HW)

    g_t = jnp.tile(gamma, 4)[:, None]                         # (C_up, 1)
    beta_t = jnp.tile(beta, 4)[:, None]

    cost = pl.CostEstimate(
        flops=N * (2 * C_up * K_tot * HW + 6 * C_up * HW),
        transcendentals=N,
        bytes_accessed=4 * (N * K_tot * HW + C_up * K_tot + C_up * HW
                            + 2 * C_up + N * C_up * HW))

    out_s2d = pl.pallas_call(
        _decoder_kernel,
        out_shape=jax.ShapeDtypeStruct((N, C_up, HW), f32),
        grid=(N,),
        in_specs=[
            pl.BlockSpec((1, K_tot, HW), lambda n: (n, 0, 0)),
            pl.BlockSpec((C_up, K_tot), lambda n: (0, 0)),
            pl.BlockSpec((C_up, HW), lambda n: (0, 0)),
            pl.BlockSpec((C_up, 1), lambda n: (0, 0)),
            pl.BlockSpec((C_up, 1), lambda n: (0, 0)),
        ],
        out_specs=pl.BlockSpec((1, C_up, HW), lambda n: (n, 0, 0)),
        compiler_params=pltpu.CompilerParams(
            dimension_semantics=("parallel",)),
        cost_estimate=cost,
    )(im2col, w_t_full, bias_t, g_t, beta_t)

    # depth-to-space fused into the final NCHW transpose (pure layout glue).
    out = out_s2d.reshape(N, 2, 2, Cout, H, W).transpose(0, 3, 4, 1, 5, 2)
    return out.reshape(N, Cout, Ho, Wo)


# ----------------------------------------------------------------------------
# Pure-JAX (XLA) reference for verification
# ----------------------------------------------------------------------------
def reference_forward(x, skip, params):
    hp = lax.Precision.HIGHEST
    w_t = params["conv_transpose_weight"]
    w_t_oihw = jnp.transpose(w_t, (1, 0, 2, 3))[:, :, ::-1, ::-1]
    up = lax.conv_general_dilated(
        x, w_t_oihw, window_strides=(1, 1), padding=((1, 2), (1, 2)),
        lhs_dilation=(2, 2), dimension_numbers=("NCHW", "OIHW", "NCHW"),
        precision=hp)
    up = up + params["conv_transpose_bias"][None, :, None, None]
    cat = jnp.concatenate([up, skip], axis=1)
    y = lax.conv_general_dilated(
        cat, params["conv_weight"], window_strides=(1, 1), padding=((1, 1), (1, 1)),
        dimension_numbers=("NCHW", "OIHW", "NCHW"), precision=hp)
    y = y + params["conv_bias"][None, :, None, None]
    mean = jnp.mean(y, axis=(1, 2, 3), keepdims=True)
    var = jnp.mean(jnp.square(y - mean), axis=(1, 2, 3), keepdims=True)
    yn = (y - mean) * lax.rsqrt(var + 1e-5)
    yn = yn * params["norm_weight"][None, :, None, None] + params["norm_bias"][None, :, None, None]
    return jnp.clip(yn, 0.0, 6.0)


if __name__ == "__main__":
    in_channels, skip_channels, out_channels = 4, 6, 8
    N, H, W = 2, 16, 16

    key = jax.random.PRNGKey(0)
    k = jax.random.split(key, 8)
    params = {
        # nn.ConvTranspose2d weight layout: (in_channels, out_channels, kh, kw)
        "conv_transpose_weight": 0.1 * jax.random.normal(k[0], (in_channels, out_channels, 3, 3), jnp.float32),
        "conv_transpose_bias": 0.1 * jax.random.normal(k[1], (out_channels,), jnp.float32),
        # nn.Conv2d weight layout: (out_channels, in_channels, kh, kw)
        "conv_weight": 0.1 * jax.random.normal(k[2], (out_channels, skip_channels + out_channels, 3, 3), jnp.float32),
        "conv_bias": 0.1 * jax.random.normal(k[3], (out_channels,), jnp.float32),
        "norm_weight": 1.0 + 0.1 * jax.random.normal(k[4], (out_channels,), jnp.float32),
        "norm_bias": 0.1 * jax.random.normal(k[5], (out_channels,), jnp.float32),
    }

    x = jax.random.normal(k[6], (N, in_channels, H, W), jnp.float32)
    skip = jax.random.normal(k[7], (N, skip_channels, 2 * H, 2 * W), jnp.float32)

    fwd = jax.jit(functools.partial(conv_transpose_decoder_2d_v2, params=params))
    out = jax.block_until_ready(fwd(x, skip))
    assert out.shape == (N, out_channels, 2 * H, 2 * W), out.shape

    ref = jax.block_until_ready(reference_forward(x, skip, params))
    assert jnp.allclose(out, ref, atol=1e-3, rtol=1e-3), float(jnp.max(jnp.abs(out - ref)))

    print("KERNEL_OK")
</pallas_src>

<mosaic_0001>
module attributes {stable_mosaic.version = 11 : i64} {
  func.func @_decoder_kernel(%arg0: i32, %arg1: memref<1x360x256xf32, #tpu.memory_space<vmem>>, %arg2: memref<32x360xf32, #tpu.memory_space<vmem>>, %arg3: memref<32x256xf32, #tpu.memory_space<vmem>>, %arg4: memref<32x1xf32, #tpu.memory_space<vmem>>, %arg5: memref<32x1xf32, #tpu.memory_space<vmem>>, %arg6: memref<1x32x256xf32, #tpu.memory_space<vmem>>) attributes {dimension_semantics = [#tpu.dimension_semantics<parallel>], iteration_bounds = array<i64: 2>, scalar_prefetch = 0 : i64, scratch_operands = 0 : i64, tpu.core_type = #tpu.core_type<tc>, window_params = [{transform_indices = @transform_0, window_bounds = array<i64: 1, 360, 256>}, {pipeline_mode = #tpu.pipeline_mode<synchronous>, transform_indices = @transform_1, window_bounds = array<i64: 32, 360>}, {pipeline_mode = #tpu.pipeline_mode<synchronous>, transform_indices = @transform_2, window_bounds = array<i64: 32, 256>}, {pipeline_mode = #tpu.pipeline_mode<synchronous>, transform_indices = @transform_3, window_bounds = array<i64: 32, 1>}, {pipeline_mode = #tpu.pipeline_mode<synchronous>, transform_indices = @transform_4, window_bounds = array<i64: 32, 1>}, {transform_indices = @transform_5, window_bounds = array<i64: 1, 32, 256>}]} {
    %c0 = arith.constant 0 : index
    %c0_0 = arith.constant 0 : index
    %0 = vector.load %arg2[%c0, %c0_0] : memref<32x360xf32, #tpu.memory_space<vmem>>, vector<32x360xf32>
    %c0_1 = arith.constant 0 : index
    %c0_2 = arith.constant 0 : index
    %c0_3 = arith.constant 0 : index
    %1 = vector.load %arg1[%c0_1, %c0_2, %c0_3] : memref<1x360x256xf32, #tpu.memory_space<vmem>>, vector<1x360x256xf32>
    %2 = vector.shape_cast %1 : vector<1x360x256xf32> to vector<360x256xf32>
    %cst = arith.constant dense<0.000000e+00> : vector<32x256xf32>
    %3 = tpu.matmul %0, %2, %cst {dimension_numbers = #tpu.dot_dimension_numbers<[1], [0], [0], [1], [0, 0, 1, 1], [], []>} : vector<32x360xf32>, vector<360x256xf32>, vector<32x256xf32> -> vector<32x256xf32>
    %c0_4 = arith.constant 0 : index
    %c0_5 = arith.constant 0 : index
    %4 = vector.load %arg3[%c0_4, %c0_5] : memref<32x256xf32, #tpu.memory_space<vmem>>, vector<32x256xf32>
    %5 = arith.addf %3, %4 : vector<32x256xf32>
    %6 = vector.shape_cast %5 : vector<32x256xf32> to vector<1x32x256xf32>
    %cst_6 = arith.constant dense<0.000000e+00> : vector<1xf32>
    %7 = vector.multi_reduction <add>, %6, %cst_6 [1, 2] : vector<1x32x256xf32> to vector<1xf32>
    %8 = vector.shape_cast %7 : vector<1xf32> to vector<1x1x1xf32>
    %9 = vector.extract %8[0, 0, 0] : f32 from vector<1x1x1xf32>
    %cst_7 = arith.constant 8.192000e+03 : f32
    %10 = arith.divf %9, %cst_7 : f32
    %11 = vector.broadcast %10 : f32 to vector<32x256xf32>
    %12 = arith.subf %5, %11 : vector<32x256xf32>
    %13 = arith.mulf %12, %12 : vector<32x256xf32>
    %14 = vector.shape_cast %13 : vector<32x256xf32> to vector<1x32x256xf32>
    %cst_8 = arith.constant dense<0.000000e+00> : vector<1xf32>
    %15 = vector.multi_reduction <add>, %14, %cst_8 [1, 2] : vector<1x32x256xf32> to vector<1xf32>
    %16 = vector.shape_cast %15 : vector<1xf32> to vector<1x1x1xf32>
    %17 = vector.extract %16[0, 0, 0] : f32 from vector<1x1x1xf32>
    %cst_9 = arith.constant 8.192000e+03 : f32
    %18 = arith.divf %17, %cst_9 : f32
    %cst_10 = arith.constant 9.99999974E-6 : f32
    %19 = arith.addf %18, %cst_10 : f32
    %20 = math.rsqrt %19 : f32
    %c0_11 = arith.constant 0 : index
    %c0_12 = arith.constant 0 : index
    %21 = vector.load %arg4[%c0_11, %c0_12] : memref<32x1xf32, #tpu.memory_space<vmem>>, vector<32x1xf32>
    %22 = vector.broadcast %20 : f32 to vector<32x1xf32>
    %23 = arith.mulf %22, %21 : vector<32x1xf32>
    %24 = vector.broadcast %23 : vector<32x1xf32> to vector<32x256xf32>
    %25 = arith.mulf %12, %24 : vector<32x256xf32>
    %c0_13 = arith.constant 0 : index
    %c0_14 = arith.constant 0 : index
    %26 = vector.load %arg5[%c0_13, %c0_14] : memref<32x1xf32, #tpu.memory_space<vmem>>, vector<32x1xf32>
    %27 = vector.broadcast %26 : vector<32x1xf32> to vector<32x256xf32>
    %28 = arith.addf %25, %27 : vector<32x256xf32>
    %cst_15 = arith.constant 0.000000e+00 : f32
    %cst_16 = arith.constant 6.000000e+00 : f32
    %29 = vector.broadcast %cst_15 : f32 to vector<32x256xf32>
    %30 = arith.maximumf %29, %28 : vector<32x256xf32>
    %31 = vector.broadcast %cst_16 : f32 to vector<32x256xf32>
    %32 = arith.minimumf %31, %30 : vector<32x256xf32>
    %c0_17 = arith.constant 0 : index
    %c0_18 = arith.constant 0 : index
    %c0_19 = arith.constant 0 : index
    %33 = vector.load %arg6[%c0_17, %c0_18, %c0_19] : memref<1x32x256xf32, #tpu.memory_space<vmem>>, vector<1x32x256xf32>
    %34 = vector.shape_cast %33 : vector<1x32x256xf32> to vector<32x256xf32>
    %35 = vector.shape_cast %32 : vector<32x256xf32> to vector<1x32x256xf32>
    tpu.vector_store %arg6[%c0_17, %c0_18, %c0_19], %35 {strides = array<i32>} : memref<1x32x256xf32, #tpu.memory_space<vmem>>, vector<1x32x256xf32>,
    return
  }
  func.func @transform_0(%arg0: i32) -> (i32, i32, i32) {
    %c0_i32 = arith.constant 0 : i32
    %c0_i32_0 = arith.constant 0 : i32
    %c0_i32_1 = arith.constant 0 : i32
    return %arg0, %c0_i32, %c0_i32_0 : i32, i32, i32
  }
  func.func @transform_1(%arg0: i32) -> (i32, i32) {
    %c0_i32 = arith.constant 0 : i32
    %c0_i32_0 = arith.constant 0 : i32
    %c0_i32_1 = arith.constant 0 : i32
    return %c0_i32, %c0_i32_0 : i32, i32
  }
  func.func @transform_2(%arg0: i32) -> (i32, i32) {
    %c0_i32 = arith.constant 0 : i32
    %c0_i32_0 = arith.constant 0 : i32
    %c0_i32_1 = arith.constant 0 : i32
    return %c0_i32, %c0_i32_0 : i32, i32
  }
  func.func @transform_3(%arg0: i32) -> (i32, i32) {
    %c0_i32 = arith.constant 0 : i32
    %c0_i32_0 = arith.constant 0 : i32
    %c0_i32_1 = arith.constant 0 : i32
    return %c0_i32, %c0_i32_0 : i32, i32
  }
  func.func @transform_4(%arg0: i32) -> (i32, i32) {
    %c0_i32 = arith.constant 0 : i32
    %c0_i32_0 = arith.constant 0 : i32
    %c0_i32_1 = arith.constant 0 : i32
    return %c0_i32, %c0_i32_0 : i32, i32
  }
  func.func @transform_5(%arg0: i32) -> (i32, i32, i32) {
    %c0_i32 = arith.constant 0 : i32
    %c0_i32_0 = arith.constant 0 : i32
    %c0_i32_1 = arith.constant 0 : i32
    return %arg0, %c0_i32, %c0_i32_0 : i32, i32, i32
  }
}

</mosaic_0001>

<llo_original>
// kernel: tile.22
$region0: #{tile.22}
  #allocation0 [shape = 's32[1]{0}', space=sflag, size = 0x4, scoped, tag = 'scoped memory for tile.22']
  %s0 = inlined_call_operand.vmem [shape: f32[8], index: 0, kind: input, shape index: {}]
  %s1 = inlined_call_operand.vmem [shape: f32[4,8], index: 1, kind: output, shape index: {}]
  // Predicated region
  $region2: #{tile.22} parent=0 // pred_check
    _
  $region3: #{tile.22} parent=0 // pred_check_branch
    %3 = sbr.rel (0) target = $region5
  $region4: #{tile.22} parent=0 // pred_region
    _
  $region5: #{tile.22} parent=0 // pred_fallthru
    _
  %v4 = vld [vmem:[%s0] ss:$0 sm:$0xff]
  %5 = vst [vmem:[%s1] sm:$0xf] %v4

// kernel: tile.1
$region0: #{tile.1}
  %s0 = inlined_call_operand.vmem [shape: f32[4,8], index: 0, kind: input, shape index: {}]
  %s1 = inlined_call_operand.vmem [shape: f32[32,1], index: 1, kind: output, shape index: {}]
  $region1: #{tile.1} parent=0
    #allocation0 [shape = 'u8[4096]{0}', space=vmem, size = 0x1000, scoped, tag = 'scoped mem for input reshape']
    %s3 = sshll.u32 1, 4
    %s4 = ssub.s32 %s3, 1
    %v5 = vld [vmem:[%s0] sm:%s4]
    %6 = vst [vmem:[#allocation0] sm:%s4] %v5
    %v7 = vld [vmem:[#allocation0] sm:$0xf]
    %vm8 = vcmask 7168
    %9 = vst.msk [vmem:[%s1] ss:$8 sm:$0xf] %vm8, %v7
    %v10 = vld [vmem:[#allocation0] sm:$0xf]
    %11 = vrot.lane.b32.xlu0 %v10, 127
    %v12 = vpop.permute.xlu0 %11
    %vm13 = vcmask 7168
    %s14 = scalar_lea.vmem %s1, 1
    %15 = vst.msk [vmem:[%s14] ss:$8 sm:$0xf] %vm13, %v12
    %v16 = vld [vmem:[#allocation0] sm:$0xf]
    %17 = vrot.lane.b32.xlu0 %v16, 126
    %v18 = vpop.permute.xlu0 %17
    %vm19 = vcmask 7168
    %s20 = scalar_lea.vmem %s1, 2
    %21 = vst.msk [vmem:[%s20] ss:$8 sm:$0xf] %vm19, %v18
    %v22 = vld [vmem:[#allocation0] sm:$0xf]
    %23 = vrot.lane.b32.xlu0 %v22, 125
    %v24 = vpop.permute.xlu0 %23
    %vm25 = vcmask 7168
    %s26 = scalar_lea.vmem %s1, 3
    %27 = vst.msk [vmem:[%s26] ss:$8 sm:$0xf] %vm25, %v24
    %v28 = vld [vmem:[#allocation0] sm:$0xf]
    %29 = vrot.lane.b32.xlu0 %v28, 124
    %v30 = vpop.permute.xlu0 %29
    %vm31 = vcmask 7168
    %s32 = scalar_lea.vmem %s1, 4
    %33 = vst.msk [vmem:[%s32] ss:$8 sm:$0xf] %vm31, %v30
    %v34 = vld [vmem:[#allocation0] sm:$0xf]
    %35 = vrot.lane.b32.xlu0 %v34, 123
    %v36 = vpop.permute.xlu0 %35
    %vm37 = vcmask 7168
    %s38 = scalar_lea.vmem %s1, 5
    %39 = vst.msk [vmem:[%s38] ss:$8 sm:$0xf] %vm37, %v36
    %v40 = vld [vmem:[#allocation0] sm:$0xf]
    %41 = vrot.lane.b32.xlu0 %v40, 122
    %v42 = vpop.permute.xlu0 %41
    %vm43 = vcmask 7168
    %s44 = scalar_lea.vmem %s1, 6
    %45 = vst.msk [vmem:[%s44] ss:$8 sm:$0xf] %vm43, %v42
    %v46 = vld [vmem:[#allocation0] sm:$0xf]
    %47 = vrot.lane.b32.xlu0 %v46, 121
    %v48 = vpop.permute.xlu0 %47
    %vm49 = vcmask 7168
    %s50 = scalar_lea.vmem %s1, 7
    %51 = vst.msk [vmem:[%s50] ss:$8 sm:$0xf] %vm49, %v48

// kernel: conv_transpose_decoder_2d_v2.1
$region0: #{conv_transpose_decoder_2d_v2.1}
  #allocation0 [shape = 'u32[]', space=smem, size = 0x4, offset = 0x4, fixed_abs, tag = 'smem constant byte address 0x4 - core index']
  #allocation1 [shape = 'u32[144,128]{1,0:T(1,128)}', space=vmem, size = 0x12000, scoped, tag = 'internal scratch']
  %s0 = inlined_call_operand.vmem [shape: f32[2,360,256], index: 0, kind: input, shape index: {}]
  %s1 = inlined_call_operand.vmem [shape: f32[32,360], index: 1, kind: input, shape index: {}]
  %s2 = inlined_call_operand.vmem [shape: f32[32,256], index: 2, kind: input, shape index: {}]
  %s3 = inlined_call_operand.vmem [shape: f32[32,1], index: 3, kind: input, shape index: {}]
  %s4 = inlined_call_operand.vmem [shape: f32[32,1], index: 4, kind: input, shape index: {}]
  %s5 = inlined_call_operand.vmem [shape: f32[2,32,256], index: 5, kind: output, shape index: {}]
  %s6 = sld [smem:[#allocation0]]
  $region53: #{conv_transpose_decoder_2d_v2.1} parent=0
    _
  %s8 = ssub.s32 1, %s6
  %s9 = scalar_select 0, %s8, %s6
  loop: start=0, step=1, limit=4
  $region2: #{conv_transpose_decoder_2d_v2.1} parent=0 // loop_pre_header
    _
  $region3: #{conv_transpose_decoder_2d_v2.1} parent=0 // loop_header
    %s11 = sphi 0, %s15
    %p12 = scmp.ge.s32.totalorder %s11, 4
    %s21 = sphi 0, %s23
    %s24 = sphi 0, %s21
    %s25 = sphi 0, %s24
    %s41 = sphi 0, %s25
    %s45 = sphi 0, %s45
    %s47 = sphi 0, %s45
    %s48 = sphi 0, %s47
    %s62 = sphi 0, %s48
    %s66 = sphi 0, %s66
    %s68 = sphi 0, %s66
    %s69 = sphi 0, %s68
    %s83 = sphi 0, %s69
    %s87 = sphi 0, %s87
    %s89 = sphi 0, %s87
    %s90 = sphi 0, %s89
    %s104 = sphi 0, %s90
    %s108 = sphi 0, %s108
    %s110 = sphi 0, %s108
    %s111 = sphi 0, %s110
    %s125 = sphi 0, %s111
    %s131 = sphi 0, %s133
    %s134 = sphi 0, %s131
    %s135 = sphi 0, %s134
    %s151 = sphi 0, %s135
  $region4: #{conv_transpose_decoder_2d_v2.1} parent=0 // loop_header_branch
    %14 = sbr.rel (%p12) target = $region8
  $region5: #{conv_transpose_decoder_2d_v2.1} parent=0 // loop_body
    %s16 = ssub.s32 %s11, 1
    %s17 = ssub.s32 %s11, 2
    %s18 = sadd.s32 %s11, 1
    %s19 = ssub.s32 %s11, %s18
    %p20 = scmp.eq.s32.totalorder %s19, 0
    %s22 = sadd.s32 %s21, 1
    %s23 = scalar_select %p20, %s21, %s22
    %p26 = pneg %p20
    %p27 = scmp.eq.s32.totalorder %s11, 1
    %p28 = por %p26, %p27
    %p29 = scmp.ne.s32.totalorder %s21, %s24
    %p30 = scmp.eq.s32.totalorder %s11, 0
    %p31 = por %p29, %p30
    %p32 = scmp.ne.s32.totalorder %s21, %s24
    %p33 = scmp.eq.s32.totalorder %s16, 1
    %p34 = por %p32, %p33
    %p35 = scmp.ne.s32.totalorder %s24, %s25
    %p36 = scmp.eq.s32.totalorder %s16, 0
    %p37 = por %p35, %p36
    %p38 = scmp.ne.s32.totalorder %s24, %s25
    %p39 = scmp.eq.s32.totalorder %s17, 1
    %p40 = por %p38, %p39
    %p42 = scmp.ne.s32.totalorder %s25, %s41
    %p43 = scmp.eq.s32.totalorder %s17, 0
    %p44 = por %p42, %p43
    %s46 = sadd.s32 %s45, 1
    %p49 = scmp.eq.s32.totalorder %s11, 1
    %p50 = scmp.ne.s32.totalorder %s45, %s47
    %p51 = scmp.eq.s32.totalorder %s11, 0
    %p52 = por %p50, %p51
    %p53 = scmp.ne.s32.totalorder %s45, %s47
    %p54 = scmp.eq.s32.totalorder %s16, 1
    %p55 = por %p53, %p54
    %p56 = scmp.ne.s32.totalorder %s47, %s48
    %p57 = scmp.eq.s32.totalorder %s16, 0
    %p58 = por %p56, %p57
    %p59 = scmp.ne.s32.totalorder %s47, %s48
    %p60 = scmp.eq.s32.totalorder %s17, 1
    %p61 = por %p59, %p60
    %p63 = scmp.ne.s32.totalorder %s48, %s62
    %p64 = scmp.eq.s32.totalorder %s17, 0
    %p65 = por %p63, %p64
    %s67 = sadd.s32 %s66, 1
    %p70 = scmp.eq.s32.totalorder %s11, 1
    %p71 = scmp.ne.s32.totalorder %s66, %s68
    %p72 = scmp.eq.s32.totalorder %s11, 0
    %p73 = por %p71, %p72
    %p74 = scmp.ne.s32.totalorder %s66, %s68
    %p75 = scmp.eq.s32.totalorder %s16, 1
    %p76 = por %p74, %p75
    %p77 = scmp.ne.s32.totalorder %s68, %s69
    %p78 = scmp.eq.s32.totalorder %s16, 0
    %p79 = por %p77, %p78
    %p80 = scmp.ne.s32.totalorder %s68, %s69
    %p81 = scmp.eq.s32.totalorder %s17, 1
    %p82 = por %p80, %p81
    %p84 = scmp.ne.s32.totalorder %s69, %s83
    %p85 = scmp.eq.s32.totalorder %s17, 0
    %p86 = por %p84, %p85
    %s88 = sadd.s32 %s87, 1
    %p91 = scmp.eq.s32.totalorder %s11, 1
    %p92 = scmp.ne.s32.totalorder %s87, %s89
    %p93 = scmp.eq.s32.totalorder %s11, 0
    %p94 = por %p92, %p93
    %p95 = scmp.ne.s32.totalorder %s87, %s89
    %p96 = scmp.eq.s32.totalorder %s16, 1
    %p97 = por %p95, %p96
    %p98 = scmp.ne.s32.totalorder %s89, %s90
    %p99 = scmp.eq.s32.totalorder %s16, 0
    %p100 = por %p98, %p99
    %p101 = scmp.ne.s32.totalorder %s89, %s90
    %p102 = scmp.eq.s32.totalorder %s17, 1
    %p103 = por %p101, %p102
    %p105 = scmp.ne.s32.totalorder %s90, %s104
    %p106 = scmp.eq.s32.totalorder %s17, 0
    %p107 = por %p105, %p106
    %s109 = sadd.s32 %s108, 1
    %p112 = scmp.eq.s32.totalorder %s11, 1
    %p113 = scmp.ne.s32.totalorder %s108, %s110
    %p114 = scmp.eq.s32.totalorder %s11, 0
    %p115 = por %p113, %p114
    %p116 = scmp.ne.s32.totalorder %s108, %s110
    %p117 = scmp.eq.s32.totalorder %s16, 1
    %p118 = por %p116, %p117
    %p119 = scmp.ne.s32.totalorder %s110, %s111
    %p120 = scmp.eq.s32.totalorder %s16, 0
    %p121 = por %p119, %p120
    %p122 = scmp.ne.s32.totalorder %s110, %s111
    %p123 = scmp.eq.s32.totalorder %s17, 1
    %p124 = por %p122, %p123
    %p126 = scmp.ne.s32.totalorder %s111, %s125
    %p127 = scmp.eq.s32.totalorder %s17, 0
    %p128 = por %p126, %p127
    %s129 = ssub.s32 %s11, %s18
    %p130 = scmp.eq.s32.totalorder %s129, 0
    %s132 = sadd.s32 %s131, 1
    %s133 = scalar_select %p130, %s131, %s132
    %p136 = pneg %p130
    %p137 = scmp.eq.s32.totalorder %s11, 1
    %p138 = por %p136, %p137
    %p139 = scmp.ne.s32.totalorder %s131, %s134
    %p140 = scmp.eq.s32.totalorder %s11, 0
    %p141 = por %p139, %p140
    %p142 = scmp.ne.s32.totalorder %s131, %s134
    %p143 = scmp.eq.s32.totalorder %s16, 1
    %p144 = por %p142, %p143
    %p145 = scmp.ne.s32.totalorder %s134, %s135
    %p146 = scmp.eq.s32.totalorder %s16, 0
    %p147 = por %p145, %p146
    %p148 = scmp.ne.s32.totalorder %s134, %s135
    %p149 = scmp.eq.s32.totalorder %s17, 1
    %p150 = por %p148, %p149
    %p152 = scmp.ne.s32.totalorder %s135, %s151
    %p153 = scmp.eq.s32.totalorder %s17, 0
    %p154 = por %p152, %p153
    %p155 = scmp.le.s32.totalorder 1, %s11
    %p156 = scmp.lt.s32.totalorder %s11, 3
    %p157 = pnand %p155, %p156
    %p158 = pneg %p157
    // Predicated region
    $region9: #{conv_transpose_decoder_2d_v2.1} parent=5 // pred_check
      _
    $region10: #{conv_transpose_decoder_2d_v2.1} parent=5 // pred_check_branch
      %160 = sbr.rel (%p157) target = $region12
    $region11: #{conv_transpose_decoder_2d_v2.1} parent=5 // pred_region
      %s161 = ssub.s32 %s11, 1
      // Predicated region
      $region13: #{conv_transpose_decoder_2d_v2.1} parent=11 // pred_check
        %p162 = pneg %p58
      $region14: #{conv_transpose_decoder_2d_v2.1} parent=11 // pred_check_branch
        %164 = sbr.rel (%p162) target = $region16
      $region15: #{conv_transpose_decoder_2d_v2.1} parent=11 // pred_region
        _
      $region16: #{conv_transpose_decoder_2d_v2.1} parent=11 // pred_fallthru
        _
      // Predicated region
      $region17: #{conv_transpose_decoder_2d_v2.1} parent=11 // pred_check
        %p165 = pneg %p79
      $region18: #{conv_transpose_decoder_2d_v2.1} parent=11 // pred_check_branch
        %167 = sbr.rel (%p165) target = $region20
      $region19: #{conv_transpose_decoder_2d_v2.1} parent=11 // pred_region
        _
      $region20: #{conv_transpose_decoder_2d_v2.1} parent=11 // pred_fallthru
        _
      // Predicated region
      $region21: #{conv_transpose_decoder_2d_v2.1} parent=11 // pred_check
        %p168 = pneg %p100
      $region22: #{conv_transpose_decoder_2d_v2.1} parent=11 // pred_check_branch
        %170 = sbr.rel (%p168) target = $region24
      $region23: #{conv_transpose_decoder_2d_v2.1} parent=11 // pred_region
        _
      $region24: #{conv_transpose_decoder_2d_v2.1} parent=11 // pred_fallthru
        _
      // Predicated region
      $region25: #{conv_transpose_decoder_2d_v2.1} parent=11 // pred_check
        %p171 = pneg %p121
      $region26: #{conv_transpose_decoder_2d_v2.1} parent=11 // pred_check_branch
        %173 = sbr.rel (%p171) target = $region28
      $region27: #{conv_transpose_decoder_2d_v2.1} parent=11 // pred_region
        _
      $region28: #{conv_transpose_decoder_2d_v2.1} parent=11 // pred_fallthru
        _
    $region12: #{conv_transpose_decoder_2d_v2.1} parent=5 // pred_fallthru
      _
    %p174 = scmp.lt.s32.totalorder %s11, 2
    // Predicated region
    $region29: #{conv_transpose_decoder_2d_v2.1} parent=5 // pred_check
      %p175 = pneg %p174
    $region30: #{conv_transpose_decoder_2d_v2.1} parent=5 // pred_check_branch
      %177 = sbr.rel (%p175) target = $region32
    $region31: #{conv_transpose_decoder_2d_v2.1} parent=5 // pred_region
      // Predicated region
      $region33: #{conv_transpose_decoder_2d_v2.1} parent=31 // pred_check
        %p178 = pneg %p31
      $region34: #{conv_transpose_decoder_2d_v2.1} parent=31 // pred_check_branch
        %180 = sbr.rel (%p178) target = $region36
      $region35: #{conv_transpose_decoder_2d_v2.1} parent=31 // pred_region
        %p181 = scmp.lt.s32.totalorder %s11, 1
        %s182 = scalar_select %p181, %s11, 1
        %s183 = smul.addr %s182, 90
        %s184 = smul.addr %s183, 8
        %s185 = scalar_lea.vmem %s0, %s184
      $region36: #{conv_transpose_decoder_2d_v2.1} parent=31 // pred_fallthru
        _
    $region32: #{conv_transpose_decoder_2d_v2.1} parent=5 // pred_fallthru
      _
    %p186 = scmp.le.s32.totalorder 1, %s11
    %p187 = scmp.lt.s32.totalorder %s11, 3
    %p188 = pnand %p186, %p187
    %p189 = pneg %p188
    // Predicated region
    $region37: #{conv_transpose_decoder_2d_v2.1} parent=5 // pred_check
      _
    $region38: #{conv_transpose_decoder_2d_v2.1} parent=5 // pred_check_branch
      %191 = sbr.rel (%p188) target = $region40
    $region39: #{conv_transpose_decoder_2d_v2.1} parent=5 // pred_region
      %s192 = ssub.s32 %s11, 1
      %p193 = scmp.lt.s32.totalorder %s16, 1
      %s194 = scalar_select %p193, %s16, 1
      %s195 = smul.addr %s194, 90
      %s196 = smul.addr %s195, 8
      %s197 = scalar_lea.vmem %s0, %s196
      %p198 = pneg %p37
      %p199 = pneg %p34
      %p200 = pneg %p58
      %p201 = pneg %p55
      %p202 = pneg %p79
      %p203 = pneg %p76
      %p204 = pneg %p100
      %p205 = pneg %p97
      %p206 = pneg %p121
      %p207 = pneg %p118
      %p208 = pneg %p147
      %p209 = pneg %p144
      %p210 = scmp.lt.s32.totalorder %s16, 1
      %s211 = scalar_select %p210, %s16, 1
      %s212 = smul.addr %s211, 8
      %s213 = smul.addr %s212, 8
      %s214 = scalar_lea.vmem %s5, %s213
      %p215 = scmp.lt.s32.totalorder %s16, 1
      %s216 = scalar_select %p215, %s16, 1
      %s217 = smul.addr %s216, 90
      %s218 = smul.addr %s217, 8
      %s219 = scalar_lea.vmem %s0, %s218
      %p220 = scmp.lt.s32.totalorder %s16, 1
      %s221 = scalar_select %p220, %s16, 1
      %s222 = smul.addr %s221, 8
      %s223 = smul.addr %s222, 8
      %s224 = scalar_lea.vmem %s5, %s223
      %v225 = vld [vmem:[%s1] sm:$0xff]
      %v226 = vld [vmem:[%s1 + $0x8] sm:$0xff]
      %v227 = vld [vmem:[%s1 + $0x10] sm:$0xff]
      %v228 = vld [vmem:[%s1 + $0x18] sm:$0xff]
      %v229 = vld [vmem:[%s1 + $0x20] sm:$0xff]
      %v230 = vld [vmem:[%s1 + $0x28] sm:$0xff]
      %v231 = vld [vmem:[%s1 + $0x30] sm:$0xff]
      %v232 = vld [vmem:[%s1 + $0x38] sm:$0xff]
      %v233 = vld [vmem:[%s1 + $0x40] sm:$0xff]
      %v234 = vld [vmem:[%s1 + $0x48] sm:$0xff]
      %v235 = vld [vmem:[%s1 + $0x50] sm:$0xff]
      %v236 = vld [vmem:[%s1 + $0x58] sm:$0xff]
      %v237 = vld [vmem:[%s219] sm:$0xff]
      %v238 = vld [vmem:[%s219 + $0x8] sm:$0xff]
      %v239 = vld [vmem:[%s219 + $0x10] sm:$0xff]
      %v240 = vld [vmem:[%s219 + $0x18] sm:$0xff]
      %v241 = vld [vmem:[%s219 + $0x20] sm:$0xff]
      %v242 = vld [vmem:[%s219 + $0x28] sm:$0xff]
      %v243 = vld [vmem:[%s219 + $0x30] sm:$0xff]
      %v244 = vld [vmem:[%s219 + $0x38] sm:$0xff]
      %v245 = vld [vmem:[%s219 + $0x40] sm:$0xff]
      %v246 = vld [vmem:[%s219 + $0x48] sm:$0xff]
      %v247 = vld [vmem:[%s219 + $0x50] sm:$0xff]
      %v248 = vld [vmem:[%s219 + $0x58] sm:$0xff]
      %v249 = vld [vmem:[%s219 + $0x60] sm:$0xff]
      %v250 = vld [vmem:[%s219 + $0x68] sm:$0xff]
      %v251 = vld [vmem:[%s219 + $0x70] sm:$0xff]
      %v252 = vld [vmem:[%s219 + $0x78] sm:$0xff]
      %v253 = vld [vmem:[%s219 + $0x80] sm:$0xff]
      %v254 = vld [vmem:[%s219 + $0x88] sm:$0xff]
      %v255 = vld [vmem:[%s219 + $0x90] sm:$0xff]
      %v256 = vld [vmem:[%s219 + $0x98] sm:$0xff]
      %v257 = vld [vmem:[%s219 + $0xa0] sm:$0xff]
      %v258 = vld [vmem:[%s219 + $0xa8] sm:$0xff]
      %v259 = vld [vmem:[%s219 + $0xb0] sm:$0xff]
      %v260 = vld [vmem:[%s219 + $0xb8] sm:$0xff]
      %v261 = vld [vmem:[%s219 + $0xc0] sm:$0xff]
      %v262 = vld [vmem:[%s219 + $0xc8] sm:$0xff]
      %v263 = vld [vmem:[%s219 + $0xd0] sm:$0xff]
      %v264 = vld [vmem:[%s219 + $0xd8] sm:$0xff]
      %v265 = vld [vmem:[%s219 + $0xe0] sm:$0xff]
      %v266 = vld [vmem:[%s219 + $0xe8] sm:$0xff]
      %v267 = vld [vmem:[%s219 + $0xf0] sm:$0xff]
      %v268 = vld [vmem:[%s219 + $0xf8] sm:$0xff]
      %v269 = vld [vmem:[%s219 + $0x100] sm:$0xff]
      %v270 = vld [vmem:[%s219 + $0x108] sm:$0xff]
      %v271 = vld [vmem:[%s219 + $0x110] sm:$0xff]
      %v272 = vld [vmem:[%s219 + $0x118] sm:$0xff]
      %v273 = vld [vmem:[%s219 + $0x120] sm:$0xff]
      %v274 = vld [vmem:[%s219 + $0x128] sm:$0xff]
      %v275 = vld [vmem:[%s219 + $0x130] sm:$0xff]
      %v276 = vld [vmem:[%s219 + $0x138] sm:$0xff]
      %v277 = vld [vmem:[%s219 + $0x140] sm:$0xff]
      %v278 = vld [vmem:[%s219 + $0x148] sm:$0xff]
      %v279 = vld [vmem:[%s219 + $0x150] sm:$0xff]
      %v280 = vld [vmem:[%s219 + $0x158] sm:$0xff]
      %v281 = vld [vmem:[%s219 + $0x160] sm:$0xff]
      %v282 = vld [vmem:[%s219 + $0x168] sm:$0xff]
      %v283 = vld [vmem:[%s219 + $0x170] sm:$0xff]
      %v284 = vld [vmem:[%s219 + $0x178] sm:$0xff]
      %v285 = vld [vmem:[%s219 + $0x180] sm:$0xff]
      %v286 = vld [vmem:[%s219 + $0x188] sm:$0xff]
      %v287 = vld [vmem:[%s219 + $0x190] sm:$0xff]
      %v288 = vld [vmem:[%s219 + $0x198] sm:$0xff]
      %v289 = vld [vmem:[%s219 + $0x1a0] sm:$0xff]
      %v290 = vld [vmem:[%s219 + $0x1a8] sm:$0xff]
      %v291 = vld [vmem:[%s219 + $0x1b0] sm:$0xff]
      %v292 = vld [vmem:[%s219 + $0x1b8] sm:$0xff]
      %v293 = vld [vmem:[%s219 + $0x1c0] sm:$0xff]
      %v294 = vld [vmem:[%s219 + $0x1c8] sm:$0xff]
      %v295 = vld [vmem:[%s219 + $0x1d0] sm:$0xff]
      %v296 = vld [vmem:[%s219 + $0x1d8] sm:$0xff]
      %v297 = vld [vmem:[%s219 + $0x1e0] sm:$0xff]
      %v298 = vld [vmem:[%s219 + $0x1e8] sm:$0xff]
      %v299 = vld [vmem:[%s219 + $0x1f0] sm:$0xff]
      %v300 = vld [vmem:[%s219 + $0x1f8] sm:$0xff]
      %v301 = vld [vmem:[%s219 + $0x200] sm:$0xff]
      %v302 = vld [vmem:[%s219 + $0x208] sm:$0xff]
      %v303 = vld [vmem:[%s219 + $0x210] sm:$0xff]
      %v304 = vld [vmem:[%s219 + $0x218] sm:$0xff]
      %v305 = vld [vmem:[%s219 + $0x220] sm:$0xff]
      %v306 = vld [vmem:[%s219 + $0x228] sm:$0xff]
      %v307 = vld [vmem:[%s219 + $0x230] sm:$0xff]
      %v308 = vld [vmem:[%s219 + $0x238] sm:$0xff]
      %v309 = vld [vmem:[%s219 + $0x240] sm:$0xff]
      %v310 = vld [vmem:[%s219 + $0x248] sm:$0xff]
      %v311 = vld [vmem:[%s219 + $0x250] sm:$0xff]
      %v312 = vld [vmem:[%s219 + $0x258] sm:$0xff]
      %v313 = vld [vmem:[%s219 + $0x260] sm:$0xff]
      %v314 = vld [vmem:[%s219 + $0x268] sm:$0xff]
      %v315 = vld [vmem:[%s219 + $0x270] sm:$0xff]
      %v316 = vld [vmem:[%s219 + $0x278] sm:$0xff]
      %v317 = vld [vmem:[%s219 + $0x280] sm:$0xff]
      %v318 = vld [vmem:[%s219 + $0x288] sm:$0xff]
      %v319 = vld [vmem:[%s219 + $0x290] sm:$0xff]
      %v320 = vld [vmem:[%s219 + $0x298] sm:$0xff]
      %v321 = vld [vmem:[%s219 + $0x2a0] sm:$0xff]
      %v322 = vld [vmem:[%s219 + $0x2a8] sm:$0xff]
      %v323 = vld [vmem:[%s219 + $0x2b0] sm:$0xff]
      %v324 = vld [vmem:[%s219 + $0x2b8] sm:$0xff]
      %v325 = vld [vmem:[%s219 + $0x2c0] sm:$0xff]
      %v326 = vld [vmem:[%s219 + $0x2c8] sm:$0xff]
      %v327 = vld [vmem:[%s2] sm:$0xff]
      %v328 = vld [vmem:[%s2 + $0x8] sm:$0xff]
      %v329 = vld [vmem:[%s2 + $0x10] sm:$0xff]
      %v330 = vld [vmem:[%s2 + $0x18] sm:$0xff]
      %v331 = vld [vmem:[%s2 + $0x20] sm:$0xff]
      %v332 = vld [vmem:[%s2 + $0x28] sm:$0xff]
      %v333 = vld [vmem:[%s2 + $0x30] sm:$0xff]
      %v334 = vld [vmem:[%s2 + $0x38] sm:$0xff]
      %vm335 = vcmask 850944
      %v337 = vsel %vm335, %v227, 0
      %v340 = vsel %vm335, %v230, 0
      %v343 = vsel %vm335, %v233, 0
      %v346 = vsel %vm335, %v236, 0
      %348 = vmatprep.subr.mxu0 %v268
      %349 = vmatpush1.msra.mxu0 %v267
      %350 = vmatprep.subr.mxu0 %v266
      %351 = vmatpush1.msra.mxu0 %v265
      %352 = vmatprep.subr.mxu0 %v264
      %353 = vmatpush1.msra.mxu0 %v263
      %354 = vmatprep.subr.mxu0 %v262
      %355 = vmatpush1.msra.mxu0 %v261
      %356 = vmatprep.subr.mxu0 %v260
      %357 = vmatpush1.msra.mxu0 %v259
      %358 = vmatprep.subr.mxu0 %v258
      %359 = vmatpush1.msra.mxu0 %v257
      %360 = vmatprep.subr.mxu0 %v256
      %361 = vmatpush1.msra.mxu0 %v255
      %362 = vmatprep.subr.mxu0 %v254
      %363 = vmatpush1.msra.mxu0 %v253
      %364 = vmatprep.subr.mxu0 %v252
      %365 = vmatpush1.msra.mxu0 %v251
      %366 = vmatprep.subr.mxu0 %v250
      %367 = vmatpush1.msra.mxu0 %v249
      %368 = vmatprep.subr.mxu0 %v248
      %369 = vmatpush1.msra.mxu0 %v247
      %370 = vmatprep.subr.mxu0 %v246
      %371 = vmatpush1.msra.mxu0 %v245
      %372 = vmatprep.subr.mxu0 %v244
      %373 = vmatpush1.msra.mxu0 %v243
      %374 = vmatprep.subr.mxu0 %v242
      %375 = vmatpush1.msra.mxu0 %v241
      %376 = vmatprep.subr.mxu0 %v240
      %377 = vmatpush1.msra.mxu0 %v239
      %378 = vmatprep.subr.mxu0 %v238
      %379 = vmatpush1.msra.mxu0 %v237
      %380 = vmatprep.subr.mxu0 %v300
      %381 = vmatpush2.msra.mxu0 %v299
      %382 = vmatprep.subr.mxu0 %v298
      %383 = vmatpush2.msra.mxu0 %v297
      %384 = vmatprep.subr.mxu0 %v296
      %385 = vmatpush2.msra.mxu0 %v295
      %386 = vmatprep.subr.mxu0 %v294
      %387 = vmatpush2.msra.mxu0 %v293
      %388 = vmatprep.subr.mxu0 %v292
      %389 = vmatpush2.msra.mxu0 %v291
      %390 = vmatprep.subr.mxu0 %v290
      %391 = vmatpush2.msra.mxu0 %v289
      %392 = vmatprep.subr.mxu0 %v288
      %393 = vmatpush2.msra.mxu0 %v287
      %394 = vmatprep.subr.mxu0 %v286
      %395 = vmatpush2.msra.mxu0 %v285
      %396 = vmatprep.subr.mxu0 %v284
      %397 = vmatpush2.msra.mxu0 %v283
      %398 = vmatprep.subr.mxu0 %v282
      %399 = vmatpush2.msra.mxu0 %v281
      %400 = vmatprep.subr.mxu0 %v280
      %401 = vmatpush2.msra.mxu0 %v279
      %402 = vmatprep.subr.mxu0 %v278
      %403 = vmatpush2.msra.mxu0 %v277
      %404 = vmatprep.subr.mxu0 %v276
      %405 = vmatpush2.msra.mxu0 %v275
      %406 = vmatprep.subr.mxu0 %v274
      %407 = vmatpush2.msra.mxu0 %v273
      %408 = vmatprep.subr.mxu0 %v272
      %409 = vmatpush2.msra.mxu0 %v271
      %410 = vmatprep.subr.mxu0 %v270
      %411 = vmatpush2.msra.mxu0 %v269
      %412 = vmatprep.mubr.f32.mxu0 %v226
      %413 = vmatmul.mubr.f32.gmra.mxu0 %v225
      %v414 = vpop.f32.mrf.mxu0
      %v415 = vadd.f32 %v327, %v414
      %v416 = vpop.f32.mrf.mxu0
      %v417 = vadd.f32 %v328, %v416
      %418 = vmatprep.mubr.f32.mxu0 %v229
      %419 = vmatmul.mubr.f32.gmra.mxu0 %v228
      %v420 = vpop.f32.mrf.mxu0
      %v421 = vadd.f32 %v329, %v420
      %v422 = vpop.f32.mrf.mxu0
      %v423 = vadd.f32 %v330, %v422
      %424 = vmatprep.mubr.f32.mxu0 %v232
      %425 = vmatmul.mubr.f32.gmra.mxu0 %v231
      %v426 = vpop.f32.mrf.mxu0
      %v427 = vadd.f32 %v331, %v426
      %v428 = vpop.f32.mrf.mxu0
      %v429 = vadd.f32 %v332, %v428
      %430 = vmatprep.mubr.f32.mxu0 %v235
      %431 = vmatmul.mubr.f32.gmra.mxu0 %v234
      %v432 = vpop.f32.mrf.mxu0
      %v433 = vadd.f32 %v333, %v432
      %v434 = vpop.f32.mrf.mxu0
      %v435 = vadd.f32 %v334, %v434
      %436 = vdwg.mxu0
      %437 = vmatprep.subr.mxu0 0.0
      %438 = vmatpush1.msra.mxu0 0.0
      %439 = vmatprep.subr.mxu0 0.0
      %440 = vmatpush1.msra.mxu0 0.0
      %441 = vmatprep.subr.mxu0 0.0
      %442 = vmatpush1.msra.mxu0 0.0
      %443 = vmatprep.subr.mxu0 %v326
      %444 = vmatpush1.msra.mxu0 %v325
      %445 = vmatprep.subr.mxu0 %v324
      %446 = vmatpush1.msra.mxu0 %v323
      %447 = vmatprep.subr.mxu0 %v322
      %448 = vmatpush1.msra.mxu0 %v321
      %449 = vmatprep.subr.mxu0 %v320
      %450 = vmatpush1.msra.mxu0 %v319
      %451 = vmatprep.subr.mxu0 %v318
      %452 = vmatpush1.msra.mxu0 %v317
      %453 = vmatprep.subr.mxu0 %v316
      %454 = vmatpush1.msra.mxu0 %v315
      %455 = vmatprep.subr.mxu0 %v314
      %456 = vmatpush1.msra.mxu0 %v313
      %457 = vmatprep.subr.mxu0 %v312
      %458 = vmatpush1.msra.mxu0 %v311
      %459 = vmatprep.subr.mxu0 %v310
      %460 = vmatpush1.msra.mxu0 %v309
      %461 = vmatprep.subr.mxu0 %v308
      %462 = vmatpush1.msra.mxu0 %v307
      %463 = vmatprep.subr.mxu0 %v306
      %464 = vmatpush1.msra.mxu0 %v305
      %465 = vmatprep.subr.mxu0 %v304
      %466 = vmatpush1.msra.mxu0 %v303
      %467 = vmatprep.subr.mxu0 %v302
      %468 = vmatpush1.msra.mxu0 %v301
      %469 = vmatprep.subr.mxu0 0.0
      %470 = vmatpush2.msra.mxu0 0.0
      %471 = vmatprep.subr.mxu0 0.0
      %472 = vmatpush2.msra.mxu0 0.0
      %473 = vmatprep.subr.mxu0 0.0
      %474 = vmatpush2.msra.mxu0 0.0
      %475 = vmatprep.subr.mxu0 0.0
      %476 = vmatpush2.msra.mxu0 0.0
      %477 = vmatprep.subr.mxu0 0.0
      %478 = vmatpush2.msra.mxu0 0.0
      %479 = vmatprep.subr.mxu0 0.0
      %480 = vmatpush2.msra.mxu0 0.0
      %481 = vmatprep.subr.mxu0 0.0
      %482 = vmatpush2.msra.mxu0 0.0
      %483 = vmatprep.subr.mxu0 0.0
      %484 = vmatpush2.msra.mxu0 0.0
      %485 = vmatprep.subr.mxu0 0.0
      %486 = vmatpush2.msra.mxu0 0.0
      %487 = vmatprep.subr.mxu0 0.0
      %488 = vmatpush2.msra.mxu0 0.0
      %489 = vmatprep.subr.mxu0 0.0
      %490 = vmatpush2.msra.mxu0 0.0
      %491 = vmatprep.subr.mxu0 0.0
      %492 = vmatpush2.msra.mxu0 0.0
      %493 = vmatprep.subr.mxu0 0.0
      %494 = vmatpush2.msra.mxu0 0.0
      %495 = vmatprep.subr.mxu0 0.0
      %496 = vmatpush2.msra.mxu0 0.0
      %497 = vmatprep.subr.mxu0 0.0
      %498 = vmatpush2.msra.mxu0 0.0
      %499 = vmatprep.subr.mxu0 0.0
      %500 = vmatpush2.msra.mxu0 0.0
      %501 = vmatprep.mubr.f32.mxu0 0.0
      %502 = vmatmul.mubr.f32.gmra.mxu0 %v337
      %v503 = vpop.f32.mrf.mxu0
      %v504 = vadd.f32 %v415, %v503
      %v505 = vpop.f32.mrf.mxu0
      %v506 = vadd.f32 %v417, %v505
      %507 = vmatprep.mubr.f32.mxu0 0.0
      %508 = vmatmul.mubr.f32.gmra.mxu0 %v340
      %v509 = vpop.f32.mrf.mxu0
      %v510 = vadd.f32 %v421, %v509
      %v511 = vpop.f32.mrf.mxu0
      %v512 = vadd.f32 %v423, %v511
      %513 = vmatprep.mubr.f32.mxu0 0.0
      %514 = vmatmul.mubr.f32.gmra.mxu0 %v343
      %v515 = vpop.f32.mrf.mxu0
      %v516 = vadd.f32 %v427, %v515
      %v517 = vpop.f32.mrf.mxu0
      %v518 = vadd.f32 %v429, %v517
      %519 = vmatprep.mubr.f32.mxu0 0.0
      %520 = vmatmul.mubr.f32.gmra.mxu0 %v346
      %v521 = vpop.f32.mrf.mxu0
      %v522 = vadd.f32 %v433, %v521
      %v523 = vpop.f32.mrf.mxu0
      %v524 = vadd.f32 %v435, %v523
      %525 = vdwg.mxu0
      %v526 = vadd.f32 %v504, %v506
      %v527 = vadd.f32 %v526, %v510
      %v528 = vadd.f32 %v527, %v512
      %v529 = vadd.f32 %v528, %v516
      %v530 = vadd.f32 %v529, %v518
      %v531 = vadd.f32 %v530, %v522
      %v532 = vadd.f32 %v531, %v524
      %533 = vadd.xlane.f32.xlu0 %v532
      %v534 = vpop.xlane.xlu0 %533
      %v535 = vrot.slane %v534, 4
      %v536 = vadd.f32 %v534, %v535
      %v537 = vrot.slane %v536, 2
      %v538 = vadd.f32 %v536, %v537
      %v539 = vrot.slane %v538, 1
      %v540 = vadd.f32 %v538, %v539
      %s541 = vtos %v540
      %v542 = vrcp.pop 8192.0
      %s543 = vtos %v542
      %s544 = smul.f32 %s541, %s543
      %v545 = vstv %s544
      %v546 = vsub.f32 %v504, %v545
      %v547 = vsub.f32 %v506, %v545
      %v548 = vsub.f32 %v510, %v545
      %v549 = vsub.f32 %v512, %v545
      %v550 = vsub.f32 %v516, %v545
      %v551 = vsub.f32 %v518, %v545
      %v552 = vsub.f32 %v522, %v545
      %v553 = vsub.f32 %v524, %v545
      %v554 = vmul.f32 %v546, %v546
      %v555 = vmul.f32 %v547, %v547
      %v556 = vmul.f32 %v548, %v548
      %v557 = vmul.f32 %v549, %v549
      %v558 = vmul.f32 %v550, %v550
      %v559 = vmul.f32 %v551, %v551
      %v560 = vmul.f32 %v552, %v552
      %v561 = vmul.f32 %v553, %v553
      %v562 = vadd.f32 %v554, %v555
      %v563 = vadd.f32 %v562, %v556
      %v564 = vadd.f32 %v563, %v557
      %v565 = vadd.f32 %v564, %v558
      %v566 = vadd.f32 %v565, %v559
      %v567 = vadd.f32 %v566, %v560
      %v568 = vadd.f32 %v567, %v561
      %569 = vadd.xlane.f32.xlu0 %v568
      %v570 = vpop.xlane.xlu0 %569
      %v571 = vrot.slane %v570, 4
      %v572 = vadd.f32 %v570, %v571
      %v573 = vrot.slane %v572, 2
      %v574 = vadd.f32 %v572, %v573
      %v575 = vrot.slane %v574, 1
      %v576 = vadd.f32 %v574, %v575
      %s577 = vtos %v576
      %v578 = vrcp.pop 8192.0
      %s579 = vtos %v578
      %s580 = smul.f32 %s577, %s579
      %s581 = sadd.f32 %s580, 1e-05
      %v582 = vstv %s581
      %v583 = vrsqrt.pop %v582
      %s584 = vtos %v583
      %v585 = vld [vmem:[%s3] sm:$0xff]
      %v586 = vld [vmem:[%s3 + $0x8] sm:$0xff]
      %v587 = vld [vmem:[%s3 + $0x10] sm:$0xff]
      %v588 = vld [vmem:[%s3 + $0x18] sm:$0xff]
      %v589 = vstv %s584
      %v590 = vmul.f32 %v589, %v585
      %v591 = vmul.f32 %v589, %v586
      %v592 = vmul.f32 %v589, %v587
      %v593 = vmul.f32 %v589, %v588
      %595 = vset.pattern.permute.xlu0 0
      %596 = vperm.xlu0 %595, %v590
      %v597 = vpop.permute.xlu0 %596
      %600 = vset.pattern.permute.xlu0 0
      %601 = vperm.xlu0 %600, %v591
      %v602 = vpop.permute.xlu0 %601
      %605 = vset.pattern.permute.xlu0 0
      %606 = vperm.xlu0 %605, %v592
      %v607 = vpop.permute.xlu0 %606
      %610 = vset.pattern.permute.xlu0 0
      %611 = vperm.xlu0 %610, %v593
      %v612 = vpop.permute.xlu0 %611
      %v614 = vmul.f32 %v546, %v597
      %v615 = vmul.f32 %v547, %v597
      %v616 = vmul.f32 %v548, %v602
      %v617 = vmul.f32 %v549, %v602
      %v618 = vmul.f32 %v550, %v607
      %v619 = vmul.f32 %v551, %v607
      %v620 = vmul.f32 %v552, %v612
      %v621 = vmul.f32 %v553, %v612
      %v622 = vld [vmem:[%s4] sm:$0xff]
      %v623 = vld [vmem:[%s4 + $0x8] sm:$0xff]
      %v624 = vld [vmem:[%s4 + $0x10] sm:$0xff]
      %v625 = vld [vmem:[%s4 + $0x18] sm:$0xff]
      %627 = vset.pattern.permute.xlu0 0
      %628 = vperm.xlu0 %627, %v622
      %v629 = vpop.permute.xlu0 %628
      %632 = vset.pattern.permute.xlu0 0
      %633 = vperm.xlu0 %632, %v623
      %v634 = vpop.permute.xlu0 %633
      %637 = vset.pattern.permute.xlu0 0
      %638 = vperm.xlu0 %637, %v624
      %v639 = vpop.permute.xlu0 %638
      %642 = vset.pattern.permute.xlu0 0
      %643 = vperm.xlu0 %642, %v625
      %v644 = vpop.permute.xlu0 %643
      %v646 = vadd.f32 %v614, %v629
      %v647 = vadd.f32 %v615, %v629
      %v648 = vadd.f32 %v616, %v634
      %v649 = vadd.f32 %v617, %v634
      %v650 = vadd.f32 %v618, %v639
      %v651 = vadd.f32 %v619, %v639
      %v652 = vadd.f32 %v620, %v644
      %v653 = vadd.f32 %v621, %v644
      %v654 = vmax.f32 %v646, 0.0
      %v655 = vmax.f32 %v647, 0.0
      %v656 = vmax.f32 %v648, 0.0
      %v657 = vmax.f32 %v649, 0.0
      %v658 = vmax.f32 %v650, 0.0
      %v659 = vmax.f32 %v651, 0.0
      %v660 = vmax.f32 %v652, 0.0
      %v661 = vmax.f32 %v653, 0.0
      %v662 = vmin.f32 %v654, 6.0
      %v663 = vmin.f32 %v655, 6.0
      %v664 = vmin.f32 %v656, 6.0
      %v665 = vmin.f32 %v657, 6.0
      %v666 = vmin.f32 %v658, 6.0
      %v667 = vmin.f32 %v659, 6.0
      %v668 = vmin.f32 %v660, 6.0
      %v669 = vmin.f32 %v661, 6.0
      %670 = vst [vmem:[%s224] sm:$0xff] %v662
      %671 = vst [vmem:[%s224 + $0x8] sm:$0xff] %v663
      %672 = vst [vmem:[%s224 + $0x10] sm:$0xff] %v664
      %673 = vst [vmem:[%s224 + $0x18] sm:$0xff] %v665
      %674 = vst [vmem:[%s224 + $0x20] sm:$0xff] %v666
      %675 = vst [vmem:[%s224 + $0x28] sm:$0xff] %v667
      %676 = vst [vmem:[%s224 + $0x30] sm:$0xff] %v668
      %677 = vst [vmem:[%s224 + $0x38] sm:$0xff] %v669
      %p678 = scmp.lt.s32.totalorder %s16, 1
      %s679 = scalar_select %p678, %s16, 1
      %s680 = smul.addr %s679, 8
      %s681 = smul.addr %s680, 8
      %s682 = scalar_lea.vmem %s5, %s681
      // Predicated region
      $region41: #{conv_transpose_decoder_2d_v2.1} parent=39 // pred_check
        %p683 = pneg %p144
      $region42: #{conv_transpose_decoder_2d_v2.1} parent=39 // pred_check_branch
        %685 = sbr.rel (%p683) target = $region44
      $region43: #{conv_transpose_decoder_2d_v2.1} parent=39 // pred_region
        _
      $region44: #{conv_transpose_decoder_2d_v2.1} parent=39 // pred_fallthru
        _
    $region40: #{conv_transpose_decoder_2d_v2.1} parent=5 // pred_fallthru
      _
    %p686 = scmp.le.s32.totalorder 2, %s11
    // Predicated region
    $region45: #{conv_transpose_decoder_2d_v2.1} parent=5 // pred_check
      %p687 = pneg %p686
    $region46: #{conv_transpose_decoder_2d_v2.1} parent=5 // pred_check_branch
      %689 = sbr.rel (%p687) target = $region48
    $region47: #{conv_transpose_decoder_2d_v2.1} parent=5 // pred_region
      %s690 = ssub.s32 %s11, 2
      // Predicated region
      $region49: #{conv_transpose_decoder_2d_v2.1} parent=47 // pred_check
        %p691 = pneg %p150
      $region50: #{conv_transpose_decoder_2d_v2.1} parent=47 // pred_check_branch
        %693 = sbr.rel (%p691) target = $region52
      $region51: #{conv_transpose_decoder_2d_v2.1} parent=47 // pred_region
        %p694 = scmp.lt.s32.totalorder %s17, 1
        %s695 = scalar_select %p694, %s17, 1
        %s696 = smul.addr %s695, 8
        %s697 = smul.addr %s696, 8
        %s698 = scalar_lea.vmem %s5, %s697
      $region52: #{conv_transpose_decoder_2d_v2.1} parent=47 // pred_fallthru
        _
    $region48: #{conv_transpose_decoder_2d_v2.1} parent=5 // pred_fallthru
      _
  $region6: #{conv_transpose_decoder_2d_v2.1} parent=0 // loop_footer
    %s15 = sadd.s32 1, %s11
  $region7: #{conv_transpose_decoder_2d_v2.1} parent=0 // loop_footer_branch
    %10 = sbr.rel target = $region3
  $region8: #{conv_transpose_decoder_2d_v2.1} parent=0 // loop_exit
    _

</llo_original>
